<compile_context>
chip_gen: v6e
topology: v6e:2x2x1
jax: 0.10.0
libtpu: 0.0.40
codegen_flags: <defaults>
</compile_context>

<pallas_src>
import jax
import jax.numpy as jnp
from jax.experimental import pallas as pl
from jax.experimental.pallas import tpu as pltpu


def _attention_pooling_kernel(x_ref, w1_ref, b1_ref, w2_ref, o_ref):
    """One (TB, S, H) batch slab per grid step: score MLP + softmax + pooling."""
    TB, S, H = x_ref.shape
    Kp = w1_ref.shape[1]

    # hidden = tanh(x @ W1 + b1) on the flattened slab -> one (TB*S, H)@(H, Kp)
    # MXU matmul with f32 accumulation. Reshape only collapses leading dims,
    # H stays on the lane axis.
    x2 = x_ref[...].reshape(TB * S, H)                                  # input dtype
    h = jnp.dot(x2, w1_ref[...], preferred_element_type=jnp.float32)   # (TB*S, Kp) f32
    h = jnp.tanh(h + b1_ref[...])                                      # EUP tanh, f32

    # Per-position scalar score = h @ w2^T, done as a lane reduction.
    # Zero-padded K columns contribute exactly 0. (b2 dropped: softmax is
    # shift-invariant.)
    s = jnp.sum(h * w2_ref[...], axis=-1, keepdims=True)               # (TB*S, 1) f32
    s = s.reshape(TB, S, 1)                                            # split leading dims only

    # softmax over the sequence axis (sublane reduce per batch row), f32.
    m = jnp.max(s, axis=1, keepdims=True)                              # (TB, 1, 1)
    e = jnp.exp(s - m)                                                 # (TB, S, 1)
    denom = jnp.sum(e, axis=1, keepdims=True)                          # (TB, 1, 1)
    p = e * pl.reciprocal(denom, approx=False)                         # (TB, S, 1)

    # Attention-weighted pooling: re-read x from VMEM (cheap, block is
    # resident) so the big activation value is not live across the score phase.
    xf = x_ref[...].astype(jnp.float32)                                # (TB, S, H)
    o_ref[...] = jnp.sum(p * xf, axis=1).astype(o_ref.dtype)           # (TB, H)


def _choose_tb(B):
    """Prefer TB=8 (aligned (8,128) output stores); keep >= 2 grid steps when B >= 2."""
    tb = 8
    while tb > 1 and pl.cdiv(B, tb) < 2:
        tb //= 2
    return tb


def attention_pooling(x, w1, b1, w2, b2=None, *, tb=None):
    """x: (B, S, H); w1: (H, K); b1: (K,); w2: (K,) (PyTorch Linear(K,1) weight row);
    b2: () scalar (unused in the kernel: softmax is shift-invariant, so the
    final-layer bias cannot change the output). Returns (B, H)."""
    B, S, H = x.shape
    K = w1.shape[1]
    del b2  # exact no-op under softmax

    # Pad K up to a multiple of 128 so the score-MLP intermediates are lane-dense.
    Kp = pl.cdiv(K, 128) * 128
    w1p = jnp.pad(w1, ((0, 0), (0, Kp - K))).astype(x.dtype)            # (H, Kp)
    b1p = jnp.pad(b1, (0, Kp - K)).astype(jnp.float32).reshape(1, Kp)   # (1, Kp) f32
    w2p = jnp.pad(w2, (0, Kp - K)).astype(jnp.float32).reshape(1, Kp)   # (1, Kp) f32

    # Batch tiling: TB rows per grid step; pad B to a multiple of TB.
    if tb is None:
        tb = _choose_tb(B)
    Bp = pl.cdiv(B, tb) * tb
    if Bp != B:
        x = jnp.pad(x, ((0, Bp - B), (0, 0), (0, 0)))  # zero rows -> finite (uniform softmax, pooled = 0)
    nb = Bp // tb

    # Explicit VMEM budget (v7x: 64 MiB physical / 32 MiB default scoped;
    # v5e default scoped is only 16 MiB). Double-buffered x/out blocks +
    # resident weights + generous intermediate headroom.
    isz = x.dtype.itemsize
    x_blk = tb * S * H * isz
    o_blk = tb * H * isz
    w_blk = H * Kp * w1p.dtype.itemsize + 2 * Kp * 4
    est = 2 * x_blk + 2 * o_blk + 2 * w_blk + 6 * tb * S * max(Kp, H) * 4
    vmem_limit = int(min(64 << 20, max(16 << 20, 2 * est)))

    out = pl.pallas_call(
        _attention_pooling_kernel,
        out_shape=jax.ShapeDtypeStruct((Bp, H), x.dtype),
        grid=(nb,),
        in_specs=[
            pl.BlockSpec((tb, S, H), lambda b: (b, 0, 0)),   # per-step activation slab
            pl.BlockSpec((H, Kp), lambda b: (0, 0)),         # weights: VMEM-resident
            pl.BlockSpec((1, Kp), lambda b: (0, 0)),
            pl.BlockSpec((1, Kp), lambda b: (0, 0)),
        ],
        out_specs=pl.BlockSpec((tb, H), lambda b: (b, 0)),   # lane-dense 2-D output
        compiler_params=pltpu.CompilerParams(
            dimension_semantics=("parallel",),
            vmem_limit_bytes=vmem_limit),
    )(x, w1p, b1p, w2p)

    return out[:B]


if __name__ == "__main__":
    # Small shapes consistent with the module: (batch, seq, hidden) = (16, 32, 128)
    B, S, H = 16, 32, 128
    K = H // 2

    key = jax.random.PRNGKey(0)
    kx, k1, kb1, k2, kb2 = jax.random.split(key, 5)
    x = jax.random.normal(kx, (B, S, H), jnp.float32)
    w1 = 0.1 * jax.random.normal(k1, (H, K), jnp.float32)
    b1 = 0.1 * jax.random.normal(kb1, (K,), jnp.float32)
    w2 = 0.1 * jax.random.normal(k2, (K,), jnp.float32)
    b2 = 0.1 * jax.random.normal(kb2, (), jnp.float32)

    fwd = jax.jit(attention_pooling)
    out = fwd(x, w1, b1, w2, b2)
    jax.block_until_ready(out)

    # Pure-JAX reference (same math as the PyTorch module, eval semantics).
    scores = jnp.tanh(x @ w1 + b1) @ w2 + b2            # (B, S)
    weights = jax.nn.softmax(scores, axis=1)            # softmax over sequence
    ref = jnp.einsum("bs,bsh->bh", weights, x)          # (B, H)

    assert out.shape == (B, H)
    assert bool(jnp.all(jnp.isfinite(out)))
    assert bool(jnp.allclose(out, ref, rtol=1e-4, atol=1e-4)), (
        float(jnp.max(jnp.abs(out - ref))))
    print("KERNEL_OK")
</pallas_src>

<mosaic_0001>
module attributes {stable_mosaic.version = 11 : i64} {
  func.func @_attention_pooling_kernel(%arg0: i32, %arg1: memref<8x32x128xf32, #tpu.memory_space<vmem>>, %arg2: memref<128x128xf32, #tpu.memory_space<vmem>>, %arg3: memref<1x128xf32, #tpu.memory_space<vmem>>, %arg4: memref<1x128xf32, #tpu.memory_space<vmem>>, %arg5: memref<8x128xf32, #tpu.memory_space<vmem>>) attributes {dimension_semantics = [#tpu.dimension_semantics<parallel>], iteration_bounds = array<i64: 2>, scalar_prefetch = 0 : i64, scratch_operands = 0 : i64, tpu.core_type = #tpu.core_type<tc>, window_params = [{transform_indices = @transform_0, window_bounds = array<i64: 8, 32, 128>}, {pipeline_mode = #tpu.pipeline_mode<synchronous>, transform_indices = @transform_1, window_bounds = array<i64: 128, 128>}, {pipeline_mode = #tpu.pipeline_mode<synchronous>, transform_indices = @transform_2, window_bounds = array<i64: 1, 128>}, {pipeline_mode = #tpu.pipeline_mode<synchronous>, transform_indices = @transform_3, window_bounds = array<i64: 1, 128>}, {transform_indices = @transform_4, window_bounds = array<i64: 8, 128>}]} {
    %c0 = arith.constant 0 : index
    %c0_0 = arith.constant 0 : index
    %c0_1 = arith.constant 0 : index
    %0 = vector.load %arg1[%c0, %c0_0, %c0_1] : memref<8x32x128xf32, #tpu.memory_space<vmem>>, vector<8x32x128xf32>
    %1 = vector.shape_cast %0 : vector<8x32x128xf32> to vector<256x128xf32>
    %c0_2 = arith.constant 0 : index
    %c0_3 = arith.constant 0 : index
    %2 = vector.load %arg2[%c0_2, %c0_3] : memref<128x128xf32, #tpu.memory_space<vmem>>, vector<128x128xf32>
    %cst = arith.constant dense<0.000000e+00> : vector<256x128xf32>
    %3 = tpu.matmul %1, %2, %cst {dimension_numbers = #tpu.dot_dimension_numbers<[1], [0], [0], [1], [0, 0, 1, 1], [], []>} : vector<256x128xf32>, vector<128x128xf32>, vector<256x128xf32> -> vector<256x128xf32>
    %c0_4 = arith.constant 0 : index
    %c0_5 = arith.constant 0 : index
    %4 = vector.load %arg3[%c0_4, %c0_5] : memref<1x128xf32, #tpu.memory_space<vmem>>, vector<1x128xf32>
    %5 = vector.broadcast %4 : vector<1x128xf32> to vector<256x128xf32>
    %6 = arith.addf %3, %5 : vector<256x128xf32>
    %7 = math.tanh %6 : vector<256x128xf32>
    %c0_6 = arith.constant 0 : index
    %c0_7 = arith.constant 0 : index
    %8 = vector.load %arg4[%c0_6, %c0_7] : memref<1x128xf32, #tpu.memory_space<vmem>>, vector<1x128xf32>
    %9 = vector.broadcast %8 : vector<1x128xf32> to vector<256x128xf32>
    %10 = arith.mulf %7, %9 : vector<256x128xf32>
    %cst_8 = arith.constant dense<0.000000e+00> : vector<256xf32>
    %11 = vector.multi_reduction <add>, %10, %cst_8 [1] : vector<256x128xf32> to vector<256xf32>
    %12 = vector.shape_cast %11 : vector<256xf32> to vector<256x1xf32>
    %13 = vector.shape_cast %12 : vector<256x1xf32> to vector<8x32x1xf32>
    %cst_9 = arith.constant dense<0xFF800000> : vector<8x1xf32>
    %14 = vector.multi_reduction <maximumf>, %13, %cst_9 [1] : vector<8x32x1xf32> to vector<8x1xf32>
    %15 = vector.shape_cast %14 : vector<8x1xf32> to vector<8x1x1xf32>
    %16 = vector.broadcast %15 : vector<8x1x1xf32> to vector<8x32x1xf32>
    %17 = arith.subf %13, %16 : vector<8x32x1xf32>
    %18 = math.exp %17 : vector<8x32x1xf32>
    %cst_10 = arith.constant dense<0.000000e+00> : vector<8x1xf32>
    %19 = vector.multi_reduction <add>, %18, %cst_10 [1] : vector<8x32x1xf32> to vector<8x1xf32>
    %20 = vector.shape_cast %19 : vector<8x1xf32> to vector<8x1x1xf32>
    %21 = tpu.reciprocal %20 : vector<8x1x1xf32> -> vector<8x1x1xf32>
    %22 = vector.broadcast %21 : vector<8x1x1xf32> to vector<8x32x1xf32>
    %23 = arith.mulf %18, %22 : vector<8x32x1xf32>
    %c0_11 = arith.constant 0 : index
    %c0_12 = arith.constant 0 : index
    %c0_13 = arith.constant 0 : index
    %24 = vector.load %arg1[%c0_11, %c0_12, %c0_13] : memref<8x32x128xf32, #tpu.memory_space<vmem>>, vector<8x32x128xf32>
    %25 = vector.broadcast %23 : vector<8x32x1xf32> to vector<8x32x128xf32>
    %26 = arith.mulf %25, %24 : vector<8x32x128xf32>
    %cst_14 = arith.constant dense<0.000000e+00> : vector<8x128xf32>
    %27 = vector.multi_reduction <add>, %26, %cst_14 [1] : vector<8x32x128xf32> to vector<8x128xf32>
    %c0_15 = arith.constant 0 : index
    %c0_16 = arith.constant 0 : index
    %28 = vector.load %arg5[%c0_15, %c0_16] : memref<8x128xf32, #tpu.memory_space<vmem>>, vector<8x128xf32>
    tpu.vector_store %arg5[%c0_15, %c0_16], %27 {strides = array<i32>} : memref<8x128xf32, #tpu.memory_space<vmem>>, vector<8x128xf32>,
    return
  }
  func.func @transform_0(%arg0: i32) -> (i32, i32, i32) {
    %c0_i32 = arith.constant 0 : i32
    %c0_i32_0 = arith.constant 0 : i32
    %c0_i32_1 = arith.constant 0 : i32
    return %arg0, %c0_i32, %c0_i32_0 : i32, i32, i32
  }
  func.func @transform_1(%arg0: i32) -> (i32, i32) {
    %c0_i32 = arith.constant 0 : i32
    %c0_i32_0 = arith.constant 0 : i32
    %c0_i32_1 = arith.constant 0 : i32
    return %c0_i32, %c0_i32_0 : i32, i32
  }
  func.func @transform_2(%arg0: i32) -> (i32, i32) {
    %c0_i32 = arith.constant 0 : i32
    %c0_i32_0 = arith.constant 0 : i32
    %c0_i32_1 = arith.constant 0 : i32
    return %c0_i32, %c0_i32_0 : i32, i32
  }
  func.func @transform_3(%arg0: i32) -> (i32, i32) {
    %c0_i32 = arith.constant 0 : i32
    %c0_i32_0 = arith.constant 0 : i32
    %c0_i32_1 = arith.constant 0 : i32
    return %c0_i32, %c0_i32_0 : i32, i32
  }
  func.func @transform_4(%arg0: i32) -> (i32, i32) {
    %c0_i32 = arith.constant 0 : i32
    %c0_i32_0 = arith.constant 0 : i32
    return %arg0, %c0_i32 : i32, i32
  }
}

</mosaic_0001>

<llo_original>
// kernel: attention_pooling.1
$region0: #{attention_pooling.1}
  #allocation0 [shape = 'u32[]', space=smem, size = 0x4, offset = 0x4, fixed_abs, tag = 'smem constant byte address 0x4 - core index']
  #allocation1 [shape = 'u32[144,128]{1,0:T(1,128)}', space=vmem, size = 0x12000, scoped, tag = 'internal scratch']
  %s0 = inlined_call_operand.hbm [shape: f32[16,32,128], index: 0, kind: input, shape index: {}]
  %s1 = inlined_call_operand.vmem [shape: f32[128,128], index: 1, kind: input, shape index: {}]
  %s2 = inlined_call_operand.vmem [shape: f32[1,128], index: 2, kind: input, shape index: {}]
  %s3 = inlined_call_operand.vmem [shape: f32[1,128], index: 3, kind: input, shape index: {}]
  %s4 = inlined_call_operand.hbm [shape: f32[16,128], index: 4, kind: output, shape index: {}]
  %s5 = sld [smem:[#allocation0]]
  $region53: #{attention_pooling.1} parent=0
    _
  %s7 = ssub.s32 1, %s5
  %s8 = scalar_select 0, %s7, %s5
  $region1: #{attention_pooling.1} parent=0
    #allocation2 [shape = 'u8[262144]{0}', space=vmem, size = 0x40000, scoped, tag = 'input window, operand 0']
    #allocation3 [shape = 's32[2]{0}', space=sflag, size = 0x8, scoped, tag = 'scoped memory for attention_pooling.1']
    #allocation4 [shape = 's32[2]{0}', space=sflag, size = 0x8, scoped, tag = 'scoped memory for attention_pooling.1']
    #allocation5 [shape = 'u8[8192]{0}', space=vmem, size = 0x2000, scoped, tag = 'output window, operand 0']
    %9 = vsyncpa [#allocation3], 0
    %s10 = scalar_lea.sflag [#allocation3], 1
    %11 = vsyncpa %s10, 0
    %12 = vsyncpa [#allocation4], 0
    %s13 = scalar_lea.sflag [#allocation4], 1
    %14 = vsyncpa %s13, 0
    loop: start=0, step=1, limit=4
    $region2: #{attention_pooling.1} parent=1 // loop_pre_header
      _
    $region3: #{attention_pooling.1} parent=1 // loop_header
      %s16 = sphi 0, %s20
      %p17 = scmp.ge.s32.totalorder %s16, 4
      %s26 = sphi 0, %s28
      %s29 = sphi 0, %s26
      %s30 = sphi 0, %s29
      %s46 = sphi 0, %s30
      %s50 = sphi 0, %s50
      %s52 = sphi 0, %s50
      %s53 = sphi 0, %s52
      %s67 = sphi 0, %s53
      %s71 = sphi 0, %s71
      %s73 = sphi 0, %s71
      %s74 = sphi 0, %s73
      %s88 = sphi 0, %s74
      %s92 = sphi 0, %s92
      %s94 = sphi 0, %s92
      %s95 = sphi 0, %s94
      %s109 = sphi 0, %s95
      %s115 = sphi 0, %s117
      %s118 = sphi 0, %s115
      %s119 = sphi 0, %s118
      %s135 = sphi 0, %s119
    $region4: #{attention_pooling.1} parent=1 // loop_header_branch
      %19 = sbr.rel (%p17) target = $region8
    $region5: #{attention_pooling.1} parent=1 // loop_body
      %s21 = ssub.s32 %s16, 1
      %s22 = ssub.s32 %s16, 2
      %s23 = sadd.s32 %s16, 1
      %s24 = ssub.s32 %s16, %s23
      %p25 = scmp.eq.s32.totalorder %s24, 0
      %s27 = sadd.s32 %s26, 1
      %s28 = scalar_select %p25, %s26, %s27
      %p31 = pneg %p25
      %p32 = scmp.eq.s32.totalorder %s16, 1
      %p33 = por %p31, %p32
      %p34 = scmp.ne.s32.totalorder %s26, %s29
      %p35 = scmp.eq.s32.totalorder %s16, 0
      %p36 = por %p34, %p35
      %p37 = scmp.ne.s32.totalorder %s26, %s29
      %p38 = scmp.eq.s32.totalorder %s21, 1
      %p39 = por %p37, %p38
      %p40 = scmp.ne.s32.totalorder %s29, %s30
      %p41 = scmp.eq.s32.totalorder %s21, 0
      %p42 = por %p40, %p41
      %p43 = scmp.ne.s32.totalorder %s29, %s30
      %p44 = scmp.eq.s32.totalorder %s22, 1
      %p45 = por %p43, %p44
      %p47 = scmp.ne.s32.totalorder %s30, %s46
      %p48 = scmp.eq.s32.totalorder %s22, 0
      %p49 = por %p47, %p48
      %s51 = sadd.s32 %s50, 1
      %p54 = scmp.eq.s32.totalorder %s16, 1
      %p55 = scmp.ne.s32.totalorder %s50, %s52
      %p56 = scmp.eq.s32.totalorder %s16, 0
      %p57 = por %p55, %p56
      %p58 = scmp.ne.s32.totalorder %s50, %s52
      %p59 = scmp.eq.s32.totalorder %s21, 1
      %p60 = por %p58, %p59
      %p61 = scmp.ne.s32.totalorder %s52, %s53
      %p62 = scmp.eq.s32.totalorder %s21, 0
      %p63 = por %p61, %p62
      %p64 = scmp.ne.s32.totalorder %s52, %s53
      %p65 = scmp.eq.s32.totalorder %s22, 1
      %p66 = por %p64, %p65
      %p68 = scmp.ne.s32.totalorder %s53, %s67
      %p69 = scmp.eq.s32.totalorder %s22, 0
      %p70 = por %p68, %p69
      %s72 = sadd.s32 %s71, 1
      %p75 = scmp.eq.s32.totalorder %s16, 1
      %p76 = scmp.ne.s32.totalorder %s71, %s73
      %p77 = scmp.eq.s32.totalorder %s16, 0
      %p78 = por %p76, %p77
      %p79 = scmp.ne.s32.totalorder %s71, %s73
      %p80 = scmp.eq.s32.totalorder %s21, 1
      %p81 = por %p79, %p80
      %p82 = scmp.ne.s32.totalorder %s73, %s74
      %p83 = scmp.eq.s32.totalorder %s21, 0
      %p84 = por %p82, %p83
      %p85 = scmp.ne.s32.totalorder %s73, %s74
      %p86 = scmp.eq.s32.totalorder %s22, 1
      %p87 = por %p85, %p86
      %p89 = scmp.ne.s32.totalorder %s74, %s88
      %p90 = scmp.eq.s32.totalorder %s22, 0
      %p91 = por %p89, %p90
      %s93 = sadd.s32 %s92, 1
      %p96 = scmp.eq.s32.totalorder %s16, 1
      %p97 = scmp.ne.s32.totalorder %s92, %s94
      %p98 = scmp.eq.s32.totalorder %s16, 0
      %p99 = por %p97, %p98
      %p100 = scmp.ne.s32.totalorder %s92, %s94
      %p101 = scmp.eq.s32.totalorder %s21, 1
      %p102 = por %p100, %p101
      %p103 = scmp.ne.s32.totalorder %s94, %s95
      %p104 = scmp.eq.s32.totalorder %s21, 0
      %p105 = por %p103, %p104
      %p106 = scmp.ne.s32.totalorder %s94, %s95
      %p107 = scmp.eq.s32.totalorder %s22, 1
      %p108 = por %p106, %p107
      %p110 = scmp.ne.s32.totalorder %s95, %s109
      %p111 = scmp.eq.s32.totalorder %s22, 0
      %p112 = por %p110, %p111
      %s113 = ssub.s32 %s16, %s23
      %p114 = scmp.eq.s32.totalorder %s113, 0
      %s116 = sadd.s32 %s115, 1
      %s117 = scalar_select %p114, %s115, %s116
      %p120 = pneg %p114
      %p121 = scmp.eq.s32.totalorder %s16, 1
      %p122 = por %p120, %p121
      %p123 = scmp.ne.s32.totalorder %s115, %s118
      %p124 = scmp.eq.s32.totalorder %s16, 0
      %p125 = por %p123, %p124
      %p126 = scmp.ne.s32.totalorder %s115, %s118
      %p127 = scmp.eq.s32.totalorder %s21, 1
      %p128 = por %p126, %p127
      %p129 = scmp.ne.s32.totalorder %s118, %s119
      %p130 = scmp.eq.s32.totalorder %s21, 0
      %p131 = por %p129, %p130
      %p132 = scmp.ne.s32.totalorder %s118, %s119
      %p133 = scmp.eq.s32.totalorder %s22, 1
      %p134 = por %p132, %p133
      %p136 = scmp.ne.s32.totalorder %s119, %s135
      %p137 = scmp.eq.s32.totalorder %s22, 0
      %p138 = por %p136, %p137
      %p139 = scmp.le.s32.totalorder 1, %s16
      %p140 = scmp.lt.s32.totalorder %s16, 3
      %p141 = pnand %p139, %p140
      %p142 = pneg %p141
      // Predicated region
      $region9: #{attention_pooling.1} parent=5 // pred_check
        _
      $region10: #{attention_pooling.1} parent=5 // pred_check_branch
        %144 = sbr.rel (%p141) target = $region12
      $region11: #{attention_pooling.1} parent=5 // pred_region
        %s145 = ssub.s32 %s16, 1
        // Predicated region
        $region13: #{attention_pooling.1} parent=11 // pred_check
          %p146 = pneg %p63
        $region14: #{attention_pooling.1} parent=11 // pred_check_branch
          %148 = sbr.rel (%p146) target = $region16
        $region15: #{attention_pooling.1} parent=11 // pred_region
          _
        $region16: #{attention_pooling.1} parent=11 // pred_fallthru
          _
        // Predicated region
        $region17: #{attention_pooling.1} parent=11 // pred_check
          %p149 = pneg %p84
        $region18: #{attention_pooling.1} parent=11 // pred_check_branch
          %151 = sbr.rel (%p149) target = $region20
        $region19: #{attention_pooling.1} parent=11 // pred_region
          _
        $region20: #{attention_pooling.1} parent=11 // pred_fallthru
          _
        // Predicated region
        $region21: #{attention_pooling.1} parent=11 // pred_check
          %p152 = pneg %p105
        $region22: #{attention_pooling.1} parent=11 // pred_check_branch
          %154 = sbr.rel (%p152) target = $region24
        $region23: #{attention_pooling.1} parent=11 // pred_region
          _
        $region24: #{attention_pooling.1} parent=11 // pred_fallthru
          _
      $region12: #{attention_pooling.1} parent=5 // pred_fallthru
        _
      %p155 = scmp.lt.s32.totalorder %s16, 2
      // Predicated region
      $region25: #{attention_pooling.1} parent=5 // pred_check
        %p156 = pneg %p155
      $region26: #{attention_pooling.1} parent=5 // pred_check_branch
        %158 = sbr.rel (%p156) target = $region28
      $region27: #{attention_pooling.1} parent=5 // pred_region
        // Predicated region
        $region29: #{attention_pooling.1} parent=27 // pred_check
          %p159 = pneg %p36
        $region30: #{attention_pooling.1} parent=27 // pred_check_branch
          %161 = sbr.rel (%p159) target = $region32
        $region31: #{attention_pooling.1} parent=27 // pred_region
          %s162 = sand.u32 %s26, 1
          %s163 = scalar_lea.sflag [#allocation3], %s162
          %s164 = sand.u32 %s26, 1
          %s165 = smul.addr %s164, 256
          %s166 = scalar_lea.vmem [#allocation2], %s165
          %s167 = smul.u32 8, %s16
          %s169 = ssub.s32 4096, 4096
          %170 = vsyncadd %s163, %s169
          %s171 = smul.addr %s167, 4
          %s172 = smul.addr %s171, 128
          %s173 = scalar_lea.hbm %s0, %s172
          %s174 = sshll.u32 %s166, 4
          %s175 = int_to_ptr.vmem [resolvable:$true] %s174
          %180 = dma.hbm_to_vmem [thread:$0]  %s173, 4096, %s175, %s163, 128, 128, 8
        $region32: #{attention_pooling.1} parent=27 // pred_fallthru
          _
      $region28: #{attention_pooling.1} parent=5 // pred_fallthru
        _
      %p181 = scmp.le.s32.totalorder 1, %s16
      %p182 = scmp.lt.s32.totalorder %s16, 3
      %p183 = pnand %p181, %p182
      %p184 = pneg %p183
      // Predicated region
      $region33: #{attention_pooling.1} parent=5 // pred_check
        _
      $region34: #{attention_pooling.1} parent=5 // pred_check_branch
        %186 = sbr.rel (%p183) target = $region36
      $region35: #{attention_pooling.1} parent=5 // pred_region
        %s187 = ssub.s32 %s16, 1
        %s188 = sand.u32 %s29, 1
        %s189 = scalar_lea.sflag [#allocation3], %s188
        %s190 = sand.u32 %s29, 1
        %s191 = smul.addr %s190, 256
        %s192 = scalar_lea.vmem [#allocation2], %s191
        // Predicated region
        $region37: #{attention_pooling.1} parent=35 // pred_check
          %p193 = pneg %p42
        $region38: #{attention_pooling.1} parent=35 // pred_check_branch
          %195 = sbr.rel (%p193) target = $region40
        $region39: #{attention_pooling.1} parent=35 // pred_region
          %196 = dma.done %s189, 4096
        $region40: #{attention_pooling.1} parent=35 // pred_fallthru
          _
        %s197 = sand.u32 %s29, 1
        %s198 = scalar_lea.sflag [#allocation3], %s197
        %s199 = sand.u32 %s29, 1
        %s200 = smul.addr %s199, 256
        %s201 = scalar_lea.vmem [#allocation2], %s200
        %p202 = pneg %p42
        %p203 = pneg %p39
        %p204 = pneg %p63
        %p205 = pneg %p60
        %p206 = pneg %p84
        %p207 = pneg %p81
        %p208 = pneg %p105
        %p209 = pneg %p102
        %p210 = pneg %p131
        %p211 = pneg %p128
        %s212 = sand.u32 %s118, 1
        %s213 = scalar_lea.sflag [#allocation4], %s212
        %s214 = sand.u32 %s118, 1
        %s215 = smul.addr %s214, 8
        %s216 = scalar_lea.vmem [#allocation5], %s215
        %s217 = smul.u32 8, %s21
        %v218 = vld [vmem:[%s192] sm:$0xff]
        %v219 = vld [vmem:[%s192 + $0x8] sm:$0xff]
        %v220 = vld [vmem:[%s192 + $0x10] sm:$0xff]
        %v221 = vld [vmem:[%s192 + $0x18] sm:$0xff]
        %v222 = vld [vmem:[%s192 + $0x20] sm:$0xff]
        %v223 = vld [vmem:[%s192 + $0x28] sm:$0xff]
        %v224 = vld [vmem:[%s192 + $0x30] sm:$0xff]
        %v225 = vld [vmem:[%s192 + $0x38] sm:$0xff]
        %v226 = vld [vmem:[%s192 + $0x40] sm:$0xff]
        %v227 = vld [vmem:[%s192 + $0x48] sm:$0xff]
        %v228 = vld [vmem:[%s192 + $0x50] sm:$0xff]
        %v229 = vld [vmem:[%s192 + $0x58] sm:$0xff]
        %v230 = vld [vmem:[%s192 + $0x60] sm:$0xff]
        %v231 = vld [vmem:[%s192 + $0x68] sm:$0xff]
        %v232 = vld [vmem:[%s192 + $0x70] sm:$0xff]
        %v233 = vld [vmem:[%s192 + $0x78] sm:$0xff]
        %v234 = vld [vmem:[%s192 + $0x80] sm:$0xff]
        %v235 = vld [vmem:[%s192 + $0x88] sm:$0xff]
        %v236 = vld [vmem:[%s192 + $0x90] sm:$0xff]
        %v237 = vld [vmem:[%s192 + $0x98] sm:$0xff]
        %v238 = vld [vmem:[%s192 + $0xa0] sm:$0xff]
        %v239 = vld [vmem:[%s192 + $0xa8] sm:$0xff]
        %v240 = vld [vmem:[%s192 + $0xb0] sm:$0xff]
        %v241 = vld [vmem:[%s192 + $0xb8] sm:$0xff]
        %v242 = vld [vmem:[%s192 + $0xc0] sm:$0xff]
        %v243 = vld [vmem:[%s192 + $0xc8] sm:$0xff]
        %v244 = vld [vmem:[%s192 + $0xd0] sm:$0xff]
        %v245 = vld [vmem:[%s192 + $0xd8] sm:$0xff]
        %v246 = vld [vmem:[%s192 + $0xe0] sm:$0xff]
        %v247 = vld [vmem:[%s192 + $0xe8] sm:$0xff]
        %v248 = vld [vmem:[%s192 + $0xf0] sm:$0xff]
        %v249 = vld [vmem:[%s192 + $0xf8] sm:$0xff]
        %v250 = vld [vmem:[%s1] sm:$0xff]
        %v251 = vld [vmem:[%s1 + $0x8] sm:$0xff]
        %v252 = vld [vmem:[%s1 + $0x10] sm:$0xff]
        %v253 = vld [vmem:[%s1 + $0x18] sm:$0xff]
        %v254 = vld [vmem:[%s1 + $0x20] sm:$0xff]
        %v255 = vld [vmem:[%s1 + $0x28] sm:$0xff]
        %v256 = vld [vmem:[%s1 + $0x30] sm:$0xff]
        %v257 = vld [vmem:[%s1 + $0x38] sm:$0xff]
        %v258 = vld [vmem:[%s1 + $0x40] sm:$0xff]
        %v259 = vld [vmem:[%s1 + $0x48] sm:$0xff]
        %v260 = vld [vmem:[%s1 + $0x50] sm:$0xff]
        %v261 = vld [vmem:[%s1 + $0x58] sm:$0xff]
        %v262 = vld [vmem:[%s1 + $0x60] sm:$0xff]
        %v263 = vld [vmem:[%s1 + $0x68] sm:$0xff]
        %v264 = vld [vmem:[%s1 + $0x70] sm:$0xff]
        %v265 = vld [vmem:[%s1 + $0x78] sm:$0xff]
        %v266 = vld [vmem:[%s2] sm:$0x1]
        %v268 = vlaneseq
        %v269 = vshrl.u32 %v268, 7
        %v270 = vsub.s32 0, %v269
        %v271 = vrot.slane %v266, %v270
        %273 = vmatprep.subr.mxu0 0.0
        %274 = vmatpush1.msra.mxu0 %v265
        %275 = vmatprep.subr.mxu0 0.0
        %276 = vmatpush1.msra.mxu0 %v264
        %277 = vmatprep.subr.mxu0 0.0
        %278 = vmatpush1.msra.mxu0 %v263
        %279 = vmatprep.subr.mxu0 0.0
        %280 = vmatpush1.msra.mxu0 %v262
        %281 = vmatprep.subr.mxu0 0.0
        %282 = vmatpush1.msra.mxu0 %v261
        %283 = vmatprep.subr.mxu0 0.0
        %284 = vmatpush1.msra.mxu0 %v260
        %285 = vmatprep.subr.mxu0 0.0
        %286 = vmatpush1.msra.mxu0 %v259
        %287 = vmatprep.subr.mxu0 0.0
        %288 = vmatpush1.msra.mxu0 %v258
        %289 = vmatprep.subr.mxu0 0.0
        %290 = vmatpush1.msra.mxu0 %v257
        %291 = vmatprep.subr.mxu0 0.0
        %292 = vmatpush1.msra.mxu0 %v256
        %293 = vmatprep.subr.mxu0 0.0
        %294 = vmatpush1.msra.mxu0 %v255
        %295 = vmatprep.subr.mxu0 0.0
        %296 = vmatpush1.msra.mxu0 %v254
        %297 = vmatprep.subr.mxu0 0.0
        %298 = vmatpush1.msra.mxu0 %v253
        %299 = vmatprep.subr.mxu0 0.0
        %300 = vmatpush1.msra.mxu0 %v252
        %301 = vmatprep.subr.mxu0 0.0
        %302 = vmatpush1.msra.mxu0 %v251
        %303 = vmatprep.subr.mxu0 0.0
        %304 = vmatpush1.msra.mxu0 %v250
        %305 = vmatprep.subr.mxu0 0.0
        %306 = vmatpush2.msra.mxu0 0.0
        %307 = vmatprep.subr.mxu0 0.0
        %308 = vmatpush2.msra.mxu0 0.0
        %309 = vmatprep.subr.mxu0 0.0
        %310 = vmatpush2.msra.mxu0 0.0
        %311 = vmatprep.subr.mxu0 0.0
        %312 = vmatpush2.msra.mxu0 0.0
        %313 = vmatprep.subr.mxu0 0.0
        %314 = vmatpush2.msra.mxu0 0.0
        %315 = vmatprep.subr.mxu0 0.0
        %316 = vmatpush2.msra.mxu0 0.0
        %317 = vmatprep.subr.mxu0 0.0
        %318 = vmatpush2.msra.mxu0 0.0
        %319 = vmatprep.subr.mxu0 0.0
        %320 = vmatpush2.msra.mxu0 0.0
        %321 = vmatprep.subr.mxu0 0.0
        %322 = vmatpush2.msra.mxu0 0.0
        %323 = vmatprep.subr.mxu0 0.0
        %324 = vmatpush2.msra.mxu0 0.0
        %325 = vmatprep.subr.mxu0 0.0
        %326 = vmatpush2.msra.mxu0 0.0
        %327 = vmatprep.subr.mxu0 0.0
        %328 = vmatpush2.msra.mxu0 0.0
        %329 = vmatprep.subr.mxu0 0.0
        %330 = vmatpush2.msra.mxu0 0.0
        %331 = vmatprep.subr.mxu0 0.0
        %332 = vmatpush2.msra.mxu0 0.0
        %333 = vmatprep.subr.mxu0 0.0
        %334 = vmatpush2.msra.mxu0 0.0
        %335 = vmatprep.subr.mxu0 0.0
        %336 = vmatpush2.msra.mxu0 0.0
        %337 = vmatprep.mubr.f32.mxu0 0.0
        %338 = vmatmul.mubr.f32.gmra.mxu0 %v218
        %v339 = vpop.f32.mrf.mxu0
        %v340 = vadd.f32 %v271, %v339
        %v341 = vpop.f32.mrf.mxu0
        %342 = vmatprep.mubr.f32.mxu0 0.0
        %343 = vmatmul.mubr.f32.gmra.mxu0 %v219
        %v344 = vpop.f32.mrf.mxu0
        %v345 = vadd.f32 %v271, %v344
        %v346 = vpop.f32.mrf.mxu0
        %347 = vmatprep.mubr.f32.mxu0 0.0
        %348 = vmatmul.mubr.f32.gmra.mxu0 %v220
        %v349 = vpop.f32.mrf.mxu0
        %v350 = vadd.f32 %v271, %v349
        %v351 = vpop.f32.mrf.mxu0
        %352 = vmatprep.mubr.f32.mxu0 0.0
        %353 = vmatmul.mubr.f32.gmra.mxu0 %v221
        %v354 = vpop.f32.mrf.mxu0
        %v355 = vadd.f32 %v271, %v354
        %v356 = vpop.f32.mrf.mxu0
        %357 = vmatprep.mubr.f32.mxu0 0.0
        %358 = vmatmul.mubr.f32.gmra.mxu0 %v222
        %v359 = vpop.f32.mrf.mxu0
        %v360 = vadd.f32 %v271, %v359
        %v361 = vpop.f32.mrf.mxu0
        %362 = vmatprep.mubr.f32.mxu0 0.0
        %363 = vmatmul.mubr.f32.gmra.mxu0 %v223
        %v364 = vpop.f32.mrf.mxu0
        %v365 = vadd.f32 %v271, %v364
        %v366 = vpop.f32.mrf.mxu0
        %367 = vmatprep.mubr.f32.mxu0 0.0
        %368 = vmatmul.mubr.f32.gmra.mxu0 %v224
        %v369 = vpop.f32.mrf.mxu0
        %v370 = vadd.f32 %v271, %v369
        %v371 = vpop.f32.mrf.mxu0
        %372 = vmatprep.mubr.f32.mxu0 0.0
        %373 = vmatmul.mubr.f32.gmra.mxu0 %v225
        %v374 = vpop.f32.mrf.mxu0
        %v375 = vadd.f32 %v271, %v374
        %v376 = vpop.f32.mrf.mxu0
        %377 = vmatprep.mubr.f32.mxu0 0.0
        %378 = vmatmul.mubr.f32.gmra.mxu0 %v226
        %v379 = vpop.f32.mrf.mxu0
        %v380 = vadd.f32 %v271, %v379
        %v381 = vpop.f32.mrf.mxu0
        %382 = vmatprep.mubr.f32.mxu0 0.0
        %383 = vmatmul.mubr.f32.gmra.mxu0 %v227
        %v384 = vpop.f32.mrf.mxu0
        %v385 = vadd.f32 %v271, %v384
        %v386 = vpop.f32.mrf.mxu0
        %387 = vmatprep.mubr.f32.mxu0 0.0
        %388 = vmatmul.mubr.f32.gmra.mxu0 %v228
        %v389 = vpop.f32.mrf.mxu0
        %v390 = vadd.f32 %v271, %v389
        %v391 = vpop.f32.mrf.mxu0
        %392 = vmatprep.mubr.f32.mxu0 0.0
        %393 = vmatmul.mubr.f32.gmra.mxu0 %v229
        %v394 = vpop.f32.mrf.mxu0
        %v395 = vadd.f32 %v271, %v394
        %v396 = vpop.f32.mrf.mxu0
        %397 = vmatprep.mubr.f32.mxu0 0.0
        %398 = vmatmul.mubr.f32.gmra.mxu0 %v230
        %v399 = vpop.f32.mrf.mxu0
        %v400 = vadd.f32 %v271, %v399
        %v401 = vpop.f32.mrf.mxu0
        %402 = vmatprep.mubr.f32.mxu0 0.0
        %403 = vmatmul.mubr.f32.gmra.mxu0 %v231
        %v404 = vpop.f32.mrf.mxu0
        %v405 = vadd.f32 %v271, %v404
        %v406 = vpop.f32.mrf.mxu0
        %407 = vmatprep.mubr.f32.mxu0 0.0
        %408 = vmatmul.mubr.f32.gmra.mxu0 %v232
        %v409 = vpop.f32.mrf.mxu0
        %v410 = vadd.f32 %v271, %v409
        %v411 = vpop.f32.mrf.mxu0
        %412 = vmatprep.mubr.f32.mxu0 0.0
        %413 = vmatmul.mubr.f32.gmra.mxu0 %v233
        %v414 = vpop.f32.mrf.mxu0
        %v415 = vadd.f32 %v271, %v414
        %v416 = vpop.f32.mrf.mxu0
        %417 = vmatprep.mubr.f32.mxu0 0.0
        %418 = vmatmul.mubr.f32.gmra.mxu0 %v234
        %v419 = vpop.f32.mrf.mxu0
        %v420 = vadd.f32 %v271, %v419
        %v421 = vpop.f32.mrf.mxu0
        %422 = vmatprep.mubr.f32.mxu0 0.0
        %423 = vmatmul.mubr.f32.gmra.mxu0 %v235
        %v424 = vpop.f32.mrf.mxu0
        %v425 = vadd.f32 %v271, %v424
        %v426 = vpop.f32.mrf.mxu0
        %427 = vmatprep.mubr.f32.mxu0 0.0
        %428 = vmatmul.mubr.f32.gmra.mxu0 %v236
        %v429 = vpop.f32.mrf.mxu0
        %v430 = vadd.f32 %v271, %v429
        %v431 = vpop.f32.mrf.mxu0
        %432 = vmatprep.mubr.f32.mxu0 0.0
        %433 = vmatmul.mubr.f32.gmra.mxu0 %v237
        %v434 = vpop.f32.mrf.mxu0
        %v435 = vadd.f32 %v271, %v434
        %v436 = vpop.f32.mrf.mxu0
        %437 = vmatprep.mubr.f32.mxu0 0.0
        %438 = vmatmul.mubr.f32.gmra.mxu0 %v238
        %v439 = vpop.f32.mrf.mxu0
        %v440 = vadd.f32 %v271, %v439
        %v441 = vpop.f32.mrf.mxu0
        %442 = vmatprep.mubr.f32.mxu0 0.0
        %443 = vmatmul.mubr.f32.gmra.mxu0 %v239
        %v444 = vpop.f32.mrf.mxu0
        %v445 = vadd.f32 %v271, %v444
        %v446 = vpop.f32.mrf.mxu0
        %447 = vmatprep.mubr.f32.mxu0 0.0
        %448 = vmatmul.mubr.f32.gmra.mxu0 %v240
        %v449 = vpop.f32.mrf.mxu0
        %v450 = vadd.f32 %v271, %v449
        %v451 = vpop.f32.mrf.mxu0
        %452 = vmatprep.mubr.f32.mxu0 0.0
        %453 = vmatmul.mubr.f32.gmra.mxu0 %v241
        %v454 = vpop.f32.mrf.mxu0
        %v455 = vadd.f32 %v271, %v454
        %v456 = vpop.f32.mrf.mxu0
        %457 = vmatprep.mubr.f32.mxu0 0.0
        %458 = vmatmul.mubr.f32.gmra.mxu0 %v242
        %v459 = vpop.f32.mrf.mxu0
        %v460 = vadd.f32 %v271, %v459
        %v461 = vpop.f32.mrf.mxu0
        %462 = vmatprep.mubr.f32.mxu0 0.0
        %463 = vmatmul.mubr.f32.gmra.mxu0 %v243
        %v464 = vpop.f32.mrf.mxu0
        %v465 = vadd.f32 %v271, %v464
        %v466 = vpop.f32.mrf.mxu0
        %467 = vmatprep.mubr.f32.mxu0 0.0
        %468 = vmatmul.mubr.f32.gmra.mxu0 %v244
        %v469 = vpop.f32.mrf.mxu0
        %v470 = vadd.f32 %v271, %v469
        %v471 = vpop.f32.mrf.mxu0
        %472 = vmatprep.mubr.f32.mxu0 0.0
        %473 = vmatmul.mubr.f32.gmra.mxu0 %v245
        %v474 = vpop.f32.mrf.mxu0
        %v475 = vadd.f32 %v271, %v474
        %v476 = vpop.f32.mrf.mxu0
        %477 = vmatprep.mubr.f32.mxu0 0.0
        %478 = vmatmul.mubr.f32.gmra.mxu0 %v246
        %v479 = vpop.f32.mrf.mxu0
        %v480 = vadd.f32 %v271, %v479
        %v481 = vpop.f32.mrf.mxu0
        %482 = vmatprep.mubr.f32.mxu0 0.0
        %483 = vmatmul.mubr.f32.gmra.mxu0 %v247
        %v484 = vpop.f32.mrf.mxu0
        %v485 = vadd.f32 %v271, %v484
        %v486 = vpop.f32.mrf.mxu0
        %487 = vmatprep.mubr.f32.mxu0 0.0
        %488 = vmatmul.mubr.f32.gmra.mxu0 %v248
        %v489 = vpop.f32.mrf.mxu0
        %v490 = vadd.f32 %v271, %v489
        %v491 = vpop.f32.mrf.mxu0
        %492 = vmatprep.mubr.f32.mxu0 0.0
        %493 = vmatmul.mubr.f32.gmra.mxu0 %v249
        %v494 = vpop.f32.mrf.mxu0
        %v495 = vadd.f32 %v271, %v494
        %v496 = vpop.f32.mrf.mxu0
        %497 = vdwg.mxu0
        %v498 = vtanh.pop %v340
        %v499 = vtanh.pop %v345
        %v500 = vtanh.pop %v350
        %v501 = vtanh.pop %v355
        %v502 = vtanh.pop %v360
        %v503 = vtanh.pop %v365
        %v504 = vtanh.pop %v370
        %v505 = vtanh.pop %v375
        %v506 = vtanh.pop %v380
        %v507 = vtanh.pop %v385
        %v508 = vtanh.pop %v390
        %v509 = vtanh.pop %v395
        %v510 = vtanh.pop %v400
        %v511 = vtanh.pop %v405
        %v512 = vtanh.pop %v410
        %v513 = vtanh.pop %v415
        %v514 = vtanh.pop %v420
        %v515 = vtanh.pop %v425
        %v516 = vtanh.pop %v430
        %v517 = vtanh.pop %v435
        %v518 = vtanh.pop %v440
        %v519 = vtanh.pop %v445
        %v520 = vtanh.pop %v450
        %v521 = vtanh.pop %v455
        %v522 = vtanh.pop %v460
        %v523 = vtanh.pop %v465
        %v524 = vtanh.pop %v470
        %v525 = vtanh.pop %v475
        %v526 = vtanh.pop %v480
        %v527 = vtanh.pop %v485
        %v528 = vtanh.pop %v490
        %v529 = vtanh.pop %v495
        %v530 = vld [vmem:[%s3] sm:$0x1]
        %v532 = vlaneseq
        %v533 = vshrl.u32 %v532, 7
        %v534 = vsub.s32 0, %v533
        %v535 = vrot.slane %v530, %v534
        %v537 = vmul.f32 %v498, %v535
        %v538 = vmul.f32 %v499, %v535
        %v539 = vmul.f32 %v500, %v535
        %v540 = vmul.f32 %v501, %v535
        %v541 = vmul.f32 %v502, %v535
        %v542 = vmul.f32 %v503, %v535
        %v543 = vmul.f32 %v504, %v535
        %v544 = vmul.f32 %v505, %v535
        %v545 = vmul.f32 %v506, %v535
        %v546 = vmul.f32 %v507, %v535
        %v547 = vmul.f32 %v508, %v535
        %v548 = vmul.f32 %v509, %v535
        %v549 = vmul.f32 %v510, %v535
        %v550 = vmul.f32 %v511, %v535
        %v551 = vmul.f32 %v512, %v535
        %v552 = vmul.f32 %v513, %v535
        %v553 = vmul.f32 %v514, %v535
        %v554 = vmul.f32 %v515, %v535
        %v555 = vmul.f32 %v516, %v535
        %v556 = vmul.f32 %v517, %v535
        %v557 = vmul.f32 %v518, %v535
        %v558 = vmul.f32 %v519, %v535
        %v559 = vmul.f32 %v520, %v535
        %v560 = vmul.f32 %v521, %v535
        %v561 = vmul.f32 %v522, %v535
        %v562 = vmul.f32 %v523, %v535
        %v563 = vmul.f32 %v524, %v535
        %v564 = vmul.f32 %v525, %v535
        %v565 = vmul.f32 %v526, %v535
        %v566 = vmul.f32 %v527, %v535
        %v567 = vmul.f32 %v528, %v535
        %v568 = vmul.f32 %v529, %v535
        %569 = vadd.xlane.f32.xlu0 %v537
        %v570 = vpop.xlane.xlu0 %569
        %571 = vadd.xlane.f32.xlu0 %v538
        %v572 = vpop.xlane.xlu0 %571
        %573 = vadd.xlane.f32.xlu0 %v539
        %v574 = vpop.xlane.xlu0 %573
        %575 = vadd.xlane.f32.xlu0 %v540
        %v576 = vpop.xlane.xlu0 %575
        %577 = vadd.xlane.f32.xlu0 %v541
        %v578 = vpop.xlane.xlu0 %577
        %579 = vadd.xlane.f32.xlu0 %v542
        %v580 = vpop.xlane.xlu0 %579
        %581 = vadd.xlane.f32.xlu0 %v543
        %v582 = vpop.xlane.xlu0 %581
        %583 = vadd.xlane.f32.xlu0 %v544
        %v584 = vpop.xlane.xlu0 %583
        %585 = vadd.xlane.f32.xlu0 %v545
        %v586 = vpop.xlane.xlu0 %585
        %587 = vadd.xlane.f32.xlu0 %v546
        %v588 = vpop.xlane.xlu0 %587
        %589 = vadd.xlane.f32.xlu0 %v547
        %v590 = vpop.xlane.xlu0 %589
        %591 = vadd.xlane.f32.xlu0 %v548
        %v592 = vpop.xlane.xlu0 %591
        %593 = vadd.xlane.f32.xlu0 %v549
        %v594 = vpop.xlane.xlu0 %593
        %595 = vadd.xlane.f32.xlu0 %v550
        %v596 = vpop.xlane.xlu0 %595
        %597 = vadd.xlane.f32.xlu0 %v551
        %v598 = vpop.xlane.xlu0 %597
        %599 = vadd.xlane.f32.xlu0 %v552
        %v600 = vpop.xlane.xlu0 %599
        %601 = vadd.xlane.f32.xlu0 %v553
        %v602 = vpop.xlane.xlu0 %601
        %603 = vadd.xlane.f32.xlu0 %v554
        %v604 = vpop.xlane.xlu0 %603
        %605 = vadd.xlane.f32.xlu0 %v555
        %v606 = vpop.xlane.xlu0 %605
        %607 = vadd.xlane.f32.xlu0 %v556
        %v608 = vpop.xlane.xlu0 %607
        %609 = vadd.xlane.f32.xlu0 %v557
        %v610 = vpop.xlane.xlu0 %609
        %611 = vadd.xlane.f32.xlu0 %v558
        %v612 = vpop.xlane.xlu0 %611
        %613 = vadd.xlane.f32.xlu0 %v559
        %v614 = vpop.xlane.xlu0 %613
        %615 = vadd.xlane.f32.xlu0 %v560
        %v616 = vpop.xlane.xlu0 %615
        %617 = vadd.xlane.f32.xlu0 %v561
        %v618 = vpop.xlane.xlu0 %617
        %619 = vadd.xlane.f32.xlu0 %v562
        %v620 = vpop.xlane.xlu0 %619
        %621 = vadd.xlane.f32.xlu0 %v563
        %v622 = vpop.xlane.xlu0 %621
        %623 = vadd.xlane.f32.xlu0 %v564
        %v624 = vpop.xlane.xlu0 %623
        %625 = vadd.xlane.f32.xlu0 %v565
        %v626 = vpop.xlane.xlu0 %625
        %627 = vadd.xlane.f32.xlu0 %v566
        %v628 = vpop.xlane.xlu0 %627
        %629 = vadd.xlane.f32.xlu0 %v567
        %v630 = vpop.xlane.xlu0 %629
        %631 = vadd.xlane.f32.xlu0 %v568
        %v632 = vpop.xlane.xlu0 %631
        %v633 = vmax.f32 %v570, %v572
        %v634 = vmax.f32 %v633, %v574
        %v635 = vmax.f32 %v634, %v576
        %v636 = vrot.slane %v635, 4
        %v637 = vmax.f32 %v635, %v636
        %v638 = vrot.slane %v637, 2
        %v639 = vmax.f32 %v637, %v638
        %v640 = vrot.slane %v639, 1
        %v641 = vmax.f32 %v639, %v640
        %v642 = vmax.f32 %v578, %v580
        %v643 = vmax.f32 %v642, %v582
        %v644 = vmax.f32 %v643, %v584
        %v645 = vrot.slane %v644, 4
        %v646 = vmax.f32 %v644, %v645
        %v647 = vrot.slane %v646, 2
        %v648 = vmax.f32 %v646, %v647
        %v649 = vrot.slane %v648, 1
        %v650 = vmax.f32 %v648, %v649
        %v651 = vmax.f32 %v586, %v588
        %v652 = vmax.f32 %v651, %v590
        %v653 = vmax.f32 %v652, %v592
        %v654 = vrot.slane %v653, 4
        %v655 = vmax.f32 %v653, %v654
        %v656 = vrot.slane %v655, 2
        %v657 = vmax.f32 %v655, %v656
        %v658 = vrot.slane %v657, 1
        %v659 = vmax.f32 %v657, %v658
        %v660 = vmax.f32 %v594, %v596
        %v661 = vmax.f32 %v660, %v598
        %v662 = vmax.f32 %v661, %v600
        %v663 = vrot.slane %v662, 4
        %v664 = vmax.f32 %v662, %v663
        %v665 = vrot.slane %v664, 2
        %v666 = vmax.f32 %v664, %v665
        %v667 = vrot.slane %v666, 1
        %v668 = vmax.f32 %v666, %v667
        %v669 = vmax.f32 %v602, %v604
        %v670 = vmax.f32 %v669, %v606
        %v671 = vmax.f32 %v670, %v608
        %v672 = vrot.slane %v671, 4
        %v673 = vmax.f32 %v671, %v672
        %v674 = vrot.slane %v673, 2
        %v675 = vmax.f32 %v673, %v674
        %v676 = vrot.slane %v675, 1
        %v677 = vmax.f32 %v675, %v676
        %v678 = vmax.f32 %v610, %v612
        %v679 = vmax.f32 %v678, %v614
        %v680 = vmax.f32 %v679, %v616
        %v681 = vrot.slane %v680, 4
        %v682 = vmax.f32 %v680, %v681
        %v683 = vrot.slane %v682, 2
        %v684 = vmax.f32 %v682, %v683
        %v685 = vrot.slane %v684, 1
        %v686 = vmax.f32 %v684, %v685
        %v687 = vmax.f32 %v618, %v620
        %v688 = vmax.f32 %v687, %v622
        %v689 = vmax.f32 %v688, %v624
        %v690 = vrot.slane %v689, 4
        %v691 = vmax.f32 %v689, %v690
        %v692 = vrot.slane %v691, 2
        %v693 = vmax.f32 %v691, %v692
        %v694 = vrot.slane %v693, 1
        %v695 = vmax.f32 %v693, %v694
        %v696 = vmax.f32 %v626, %v628
        %v697 = vmax.f32 %v696, %v630
        %v698 = vmax.f32 %v697, %v632
        %v699 = vrot.slane %v698, 4
        %v700 = vmax.f32 %v698, %v699
        %v701 = vrot.slane %v700, 2
        %v702 = vmax.f32 %v700, %v701
        %v703 = vrot.slane %v702, 1
        %v704 = vmax.f32 %v702, %v703
        %v705 = vsub.f32 %v570, %v641
        %v706 = vsub.f32 %v572, %v641
        %v707 = vsub.f32 %v574, %v641
        %v708 = vsub.f32 %v576, %v641
        %v709 = vsub.f32 %v578, %v650
        %v710 = vsub.f32 %v580, %v650
        %v711 = vsub.f32 %v582, %v650
        %v712 = vsub.f32 %v584, %v650
        %v713 = vsub.f32 %v586, %v659
        %v714 = vsub.f32 %v588, %v659
        %v715 = vsub.f32 %v590, %v659
        %v716 = vsub.f32 %v592, %v659
        %v717 = vsub.f32 %v594, %v668
        %v718 = vsub.f32 %v596, %v668
        %v719 = vsub.f32 %v598, %v668
        %v720 = vsub.f32 %v600, %v668
        %v721 = vsub.f32 %v602, %v677
        %v722 = vsub.f32 %v604, %v677
        %v723 = vsub.f32 %v606, %v677
        %v724 = vsub.f32 %v608, %v677
        %v725 = vsub.f32 %v610, %v686
        %v726 = vsub.f32 %v612, %v686
        %v727 = vsub.f32 %v614, %v686
        %v728 = vsub.f32 %v616, %v686
        %v729 = vsub.f32 %v618, %v695
        %v730 = vsub.f32 %v620, %v695
        %v731 = vsub.f32 %v622, %v695
        %v732 = vsub.f32 %v624, %v695
        %v733 = vsub.f32 %v626, %v704
        %v734 = vsub.f32 %v628, %v704
        %v735 = vsub.f32 %v630, %v704
        %v736 = vsub.f32 %v632, %v704
        %v737 = vmul.f32 %v705, 1.442695
        %v738 = vpow.pop %v737
        %v739 = vmul.f32 %v706, 1.442695
        %v740 = vpow.pop %v739
        %v741 = vmul.f32 %v707, 1.442695
        %v742 = vpow.pop %v741
        %v743 = vmul.f32 %v708, 1.442695
        %v744 = vpow.pop %v743
        %v745 = vmul.f32 %v709, 1.442695
        %v746 = vpow.pop %v745
        %v747 = vmul.f32 %v710, 1.442695
        %v748 = vpow.pop %v747
        %v749 = vmul.f32 %v711, 1.442695
        %v750 = vpow.pop %v749
        %v751 = vmul.f32 %v712, 1.442695
        %v752 = vpow.pop %v751
        %v753 = vmul.f32 %v713, 1.442695
        %v754 = vpow.pop %v753
        %v755 = vmul.f32 %v714, 1.442695
        %v756 = vpow.pop %v755
        %v757 = vmul.f32 %v715, 1.442695
        %v758 = vpow.pop %v757
        %v759 = vmul.f32 %v716, 1.442695
        %v760 = vpow.pop %v759
        %v761 = vmul.f32 %v717, 1.442695
        %v762 = vpow.pop %v761
        %v763 = vmul.f32 %v718, 1.442695
        %v764 = vpow.pop %v763
        %v765 = vmul.f32 %v719, 1.442695
        %v766 = vpow.pop %v765
        %v767 = vmul.f32 %v720, 1.442695
        %v768 = vpow.pop %v767
        %v769 = vmul.f32 %v721, 1.442695
        %v770 = vpow.pop %v769
        %v771 = vmul.f32 %v722, 1.442695
        %v772 = vpow.pop %v771
        %v773 = vmul.f32 %v723, 1.442695
        %v774 = vpow.pop %v773
        %v775 = vmul.f32 %v724, 1.442695
        %v776 = vpow.pop %v775
        %v777 = vmul.f32 %v725, 1.442695
        %v778 = vpow.pop %v777
        %v779 = vmul.f32 %v726, 1.442695
        %v780 = vpow.pop %v779
        %v781 = vmul.f32 %v727, 1.442695
        %v782 = vpow.pop %v781
        %v783 = vmul.f32 %v728, 1.442695
        %v784 = vpow.pop %v783
        %v785 = vmul.f32 %v729, 1.442695
        %v786 = vpow.pop %v785
        %v787 = vmul.f32 %v730, 1.442695
        %v788 = vpow.pop %v787
        %v789 = vmul.f32 %v731, 1.442695
        %v790 = vpow.pop %v789
        %v791 = vmul.f32 %v732, 1.442695
        %v792 = vpow.pop %v791
        %v793 = vmul.f32 %v733, 1.442695
        %v794 = vpow.pop %v793
        %v795 = vmul.f32 %v734, 1.442695
        %v796 = vpow.pop %v795
        %v797 = vmul.f32 %v735, 1.442695
        %v798 = vpow.pop %v797
        %v799 = vmul.f32 %v736, 1.442695
        %v800 = vpow.pop %v799
        %v801 = vadd.f32 %v738, %v740
        %v802 = vadd.f32 %v801, %v742
        %v803 = vadd.f32 %v802, %v744
        %v804 = vrot.slane %v803, 4
        %v805 = vadd.f32 %v803, %v804
        %v806 = vrot.slane %v805, 2
        %v807 = vadd.f32 %v805, %v806
        %v808 = vrot.slane %v807, 1
        %v809 = vadd.f32 %v807, %v808
        %v810 = vadd.f32 %v746, %v748
        %v811 = vadd.f32 %v810, %v750
        %v812 = vadd.f32 %v811, %v752
        %v813 = vrot.slane %v812, 4
        %v814 = vadd.f32 %v812, %v813
        %v815 = vrot.slane %v814, 2
        %v816 = vadd.f32 %v814, %v815
        %v817 = vrot.slane %v816, 1
        %v818 = vadd.f32 %v816, %v817
        %v819 = vadd.f32 %v754, %v756
        %v820 = vadd.f32 %v819, %v758
        %v821 = vadd.f32 %v820, %v760
        %v822 = vrot.slane %v821, 4
        %v823 = vadd.f32 %v821, %v822
        %v824 = vrot.slane %v823, 2
        %v825 = vadd.f32 %v823, %v824
        %v826 = vrot.slane %v825, 1
        %v827 = vadd.f32 %v825, %v826
        %v828 = vadd.f32 %v762, %v764
        %v829 = vadd.f32 %v828, %v766
        %v830 = vadd.f32 %v829, %v768
        %v831 = vrot.slane %v830, 4
        %v832 = vadd.f32 %v830, %v831
        %v833 = vrot.slane %v832, 2
        %v834 = vadd.f32 %v832, %v833
        %v835 = vrot.slane %v834, 1
        %v836 = vadd.f32 %v834, %v835
        %v837 = vadd.f32 %v770, %v772
        %v838 = vadd.f32 %v837, %v774
        %v839 = vadd.f32 %v838, %v776
        %v840 = vrot.slane %v839, 4
        %v841 = vadd.f32 %v839, %v840
        %v842 = vrot.slane %v841, 2
        %v843 = vadd.f32 %v841, %v842
        %v844 = vrot.slane %v843, 1
        %v845 = vadd.f32 %v843, %v844
        %v846 = vadd.f32 %v778, %v780
        %v847 = vadd.f32 %v846, %v782
        %v848 = vadd.f32 %v847, %v784
        %v849 = vrot.slane %v848, 4
        %v850 = vadd.f32 %v848, %v849
        %v851 = vrot.slane %v850, 2
        %v852 = vadd.f32 %v850, %v851
        %v853 = vrot.slane %v852, 1
        %v854 = vadd.f32 %v852, %v853
        %v855 = vadd.f32 %v786, %v788
        %v856 = vadd.f32 %v855, %v790
        %v857 = vadd.f32 %v856, %v792
        %v858 = vrot.slane %v857, 4
        %v859 = vadd.f32 %v857, %v858
        %v860 = vrot.slane %v859, 2
        %v861 = vadd.f32 %v859, %v860
        %v862 = vrot.slane %v861, 1
        %v863 = vadd.f32 %v861, %v862
        %v864 = vadd.f32 %v794, %v796
        %v865 = vadd.f32 %v864, %v798
        %v866 = vadd.f32 %v865, %v800
        %v867 = vrot.slane %v866, 4
        %v868 = vadd.f32 %v866, %v867
        %v869 = vrot.slane %v868, 2
        %v870 = vadd.f32 %v868, %v869
        %v871 = vrot.slane %v870, 1
        %v872 = vadd.f32 %v870, %v871
        %v873 = vrcp.pop %v809
        %v874 = vrcp.pop %v818
        %v875 = vrcp.pop %v827
        %v876 = vrcp.pop %v836
        %v877 = vrcp.pop %v845
        %v878 = vrcp.pop %v854
        %v879 = vrcp.pop %v863
        %v880 = vrcp.pop %v872
        %v881 = vmul.f32 %v738, %v873
        %v882 = vmul.f32 %v740, %v873
        %v883 = vmul.f32 %v742, %v873
        %v884 = vmul.f32 %v744, %v873
        %v885 = vmul.f32 %v746, %v874
        %v886 = vmul.f32 %v748, %v874
        %v887 = vmul.f32 %v750, %v874
        %v888 = vmul.f32 %v752, %v874
        %v889 = vmul.f32 %v754, %v875
        %v890 = vmul.f32 %v756, %v875
        %v891 = vmul.f32 %v758, %v875
        %v892 = vmul.f32 %v760, %v875
        %v893 = vmul.f32 %v762, %v876
        %v894 = vmul.f32 %v764, %v876
        %v895 = vmul.f32 %v766, %v876
        %v896 = vmul.f32 %v768, %v876
        %v897 = vmul.f32 %v770, %v877
        %v898 = vmul.f32 %v772, %v877
        %v899 = vmul.f32 %v774, %v877
        %v900 = vmul.f32 %v776, %v877
        %v901 = vmul.f32 %v778, %v878
        %v902 = vmul.f32 %v780, %v878
        %v903 = vmul.f32 %v782, %v878
        %v904 = vmul.f32 %v784, %v878
        %v905 = vmul.f32 %v786, %v879
        %v906 = vmul.f32 %v788, %v879
        %v907 = vmul.f32 %v790, %v879
        %v908 = vmul.f32 %v792, %v879
        %v909 = vmul.f32 %v794, %v880
        %v910 = vmul.f32 %v796, %v880
        %v911 = vmul.f32 %v798, %v880
        %v912 = vmul.f32 %v800, %v880
        %v913 = vmul.f32 %v881, %v218
        %v914 = vmul.f32 %v882, %v219
        %v915 = vmul.f32 %v883, %v220
        %v916 = vmul.f32 %v884, %v221
        %v917 = vmul.f32 %v885, %v222
        %v918 = vmul.f32 %v886, %v223
        %v919 = vmul.f32 %v887, %v224
        %v920 = vmul.f32 %v888, %v225
        %v921 = vmul.f32 %v889, %v226
        %v922 = vmul.f32 %v890, %v227
        %v923 = vmul.f32 %v891, %v228
        %v924 = vmul.f32 %v892, %v229
        %v925 = vmul.f32 %v893, %v230
        %v926 = vmul.f32 %v894, %v231
        %v927 = vmul.f32 %v895, %v232
        %v928 = vmul.f32 %v896, %v233
        %v929 = vmul.f32 %v897, %v234
        %v930 = vmul.f32 %v898, %v235
        %v931 = vmul.f32 %v899, %v236
        %v932 = vmul.f32 %v900, %v237
        %v933 = vmul.f32 %v901, %v238
        %v934 = vmul.f32 %v902, %v239
        %v935 = vmul.f32 %v903, %v240
        %v936 = vmul.f32 %v904, %v241
        %v937 = vmul.f32 %v905, %v242
        %v938 = vmul.f32 %v906, %v243
        %v939 = vmul.f32 %v907, %v244
        %v940 = vmul.f32 %v908, %v245
        %v941 = vmul.f32 %v909, %v246
        %v942 = vmul.f32 %v910, %v247
        %v943 = vmul.f32 %v911, %v248
        %v944 = vmul.f32 %v912, %v249
        %v945 = vadd.f32 %v913, %v914
        %v946 = vadd.f32 %v945, %v915
        %v947 = vadd.f32 %v946, %v916
        %v948 = vrot.slane %v947, 4
        %v949 = vadd.f32 %v947, %v948
        %v950 = vrot.slane %v949, 2
        %v951 = vadd.f32 %v949, %v950
        %v952 = vrot.slane %v951, 1
        %v953 = vadd.f32 %v951, %v952
        %v954 = vadd.f32 %v917, %v918
        %v955 = vadd.f32 %v954, %v919
        %v956 = vadd.f32 %v955, %v920
        %v957 = vrot.slane %v956, 4
        %v958 = vadd.f32 %v956, %v957
        %v959 = vrot.slane %v958, 2
        %v960 = vadd.f32 %v958, %v959
        %v961 = vrot.slane %v960, 1
        %v962 = vadd.f32 %v960, %v961
        %v963 = vadd.f32 %v921, %v922
        %v964 = vadd.f32 %v963, %v923
        %v965 = vadd.f32 %v964, %v924
        %v966 = vrot.slane %v965, 4
        %v967 = vadd.f32 %v965, %v966
        %v968 = vrot.slane %v967, 2
        %v969 = vadd.f32 %v967, %v968
        %v970 = vrot.slane %v969, 1
        %v971 = vadd.f32 %v969, %v970
        %v972 = vadd.f32 %v925, %v926
        %v973 = vadd.f32 %v972, %v927
        %v974 = vadd.f32 %v973, %v928
        %v975 = vrot.slane %v974, 4
        %v976 = vadd.f32 %v974, %v975
        %v977 = vrot.slane %v976, 2
        %v978 = vadd.f32 %v976, %v977
        %v979 = vrot.slane %v978, 1
        %v980 = vadd.f32 %v978, %v979
        %v981 = vadd.f32 %v929, %v930
        %v982 = vadd.f32 %v981, %v931
        %v983 = vadd.f32 %v982, %v932
        %v984 = vrot.slane %v983, 4
        %v985 = vadd.f32 %v983, %v984
        %v986 = vrot.slane %v985, 2
        %v987 = vadd.f32 %v985, %v986
        %v988 = vrot.slane %v987, 1
        %v989 = vadd.f32 %v987, %v988
        %v990 = vadd.f32 %v933, %v934
        %v991 = vadd.f32 %v990, %v935
        %v992 = vadd.f32 %v991, %v936
        %v993 = vrot.slane %v992, 4
        %v994 = vadd.f32 %v992, %v993
        %v995 = vrot.slane %v994, 2
        %v996 = vadd.f32 %v994, %v995
        %v997 = vrot.slane %v996, 1
        %v998 = vadd.f32 %v996, %v997
        %v999 = vadd.f32 %v937, %v938
        %v1000 = vadd.f32 %v999, %v939
        %v1001 = vadd.f32 %v1000, %v940
        %v1002 = vrot.slane %v1001, 4
        %v1003 = vadd.f32 %v1001, %v1002
        %v1004 = vrot.slane %v1003, 2
        %v1005 = vadd.f32 %v1003, %v1004
        %v1006 = vrot.slane %v1005, 1
        %v1007 = vadd.f32 %v1005, %v1006
        %v1008 = vadd.f32 %v941, %v942
        %v1009 = vadd.f32 %v1008, %v943
        %v1010 = vadd.f32 %v1009, %v944
        %v1011 = vrot.slane %v1010, 4
        %v1012 = vadd.f32 %v1010, %v1011
        %v1013 = vrot.slane %v1012, 2
        %v1014 = vadd.f32 %v1012, %v1013
        %v1015 = vrot.slane %v1014, 1
        %v1016 = vadd.f32 %v1014, %v1015
        %vm1025 = vcmask 1041409
        %v1026 = vsel %vm1025, %v962, %v953
        %vm1027 = vcmask 1042434
        %v1028 = vsel %vm1027, %v971, %v1026
        %vm1029 = vcmask 1043459
        %v1030 = vsel %vm1029, %v980, %v1028
        %vm1031 = vcmask 1044484
        %v1032 = vsel %vm1031, %v989, %v1030
        %vm1033 = vcmask 1045509
        %v1034 = vsel %vm1033, %v998, %v1032
        %vm1035 = vcmask 1046534
        %v1036 = vsel %vm1035, %v1007, %v1034
        %vm1037 = vcmask 1047559
        %v1038 = vsel %vm1037, %v1016, %v1036
        %1040 = vst [vmem:[%s216] sm:$0xff] %v1038
        %s1041 = sand.u32 %s118, 1
        %s1042 = scalar_lea.sflag [#allocation4], %s1041
        %s1043 = sand.u32 %s118, 1
        %s1044 = smul.addr %s1043, 8
        %s1045 = scalar_lea.vmem [#allocation5], %s1044
        // Predicated region
        $region41: #{attention_pooling.1} parent=35 // pred_check
          %p1046 = pneg %p128
        $region42: #{attention_pooling.1} parent=35 // pred_check_branch
          %1048 = sbr.rel (%p1046) target = $region44
        $region43: #{attention_pooling.1} parent=35 // pred_region
          %s1050 = ssub.s32 128, 128
          %1051 = vsyncadd %s1042, %s1050
          %s1052 = smul.addr %s21, 128
          %s1053 = scalar_lea.hbm %s4, %s1052
          %s1055 = sshll.u32 %s1045, 4
          %s1056 = int_to_ptr.vmem [resolvable:$true] %s1055
          %1058 = dma.vmem_to_hbm [thread:$0]  %s1056, 128, %s1053, %s1042
        $region44: #{attention_pooling.1} parent=35 // pred_fallthru
          _
      $region36: #{attention_pooling.1} parent=5 // pred_fallthru
        _
      %p1059 = scmp.le.s32.totalorder 2, %s16
      // Predicated region
      $region45: #{attention_pooling.1} parent=5 // pred_check
        %p1060 = pneg %p1059
      $region46: #{attention_pooling.1} parent=5 // pred_check_branch
        %1062 = sbr.rel (%p1060) target = $region48
      $region47: #{attention_pooling.1} parent=5 // pred_region
        %s1063 = ssub.s32 %s16, 2
        // Predicated region
        $region49: #{attention_pooling.1} parent=47 // pred_check
          %p1064 = pneg %p134
        $region50: #{attention_pooling.1} parent=47 // pred_check_branch
          %1066 = sbr.rel (%p1064) target = $region52
        $region51: #{attention_pooling.1} parent=47 // pred_region
          %s1067 = sand.u32 %s119, 1
          %s1068 = scalar_lea.sflag [#allocation4], %s1067
          %s1069 = sand.u32 %s119, 1
          %s1070 = smul.addr %s1069, 8
          %s1071 = scalar_lea.vmem [#allocation5], %s1070
          %1072 = dma.done %s1068, 128
        $region52: #{attention_pooling.1} parent=47 // pred_fallthru
          _
      $region48: #{attention_pooling.1} parent=5 // pred_fallthru
        _
    $region6: #{attention_pooling.1} parent=1 // loop_footer
      %s20 = sadd.s32 1, %s16
    $region7: #{attention_pooling.1} parent=1 // loop_footer_branch
      %15 = sbr.rel target = $region3
    $region8: #{attention_pooling.1} parent=1 // loop_exit
      _
    %1073 = vsyncpa [#allocation3], 1
    %s1074 = scalar_lea.sflag [#allocation3], 1
    %1075 = vsyncpa %s1074, 1
    %1076 = vsyncpa [#allocation4], 1
    %s1077 = scalar_lea.sflag [#allocation4], 1
    %1078 = vsyncpa %s1077, 1

</llo_original>
